<compile_context>
chip_gen: v5e
topology: v5e:2x2
jax: 0.10.0
libtpu: 0.0.40
codegen_flags: <defaults>
</compile_context>

<pallas_src>
import functools

import jax
import jax.numpy as jnp
from jax.experimental import pallas as pl
from jax.experimental.pallas import tpu as pltpu


def _entity_classifier_kernel(pm_ref, g_ref, l_ref, w1_ref, b_ref, w2_ref,
                              out_ref, feat_ref, *, hs, num_ins):
    pm = pm_ref[0]                                   # (P, I + I*C) bf16
    p2i = pm[:, :num_ins]                            # (P, I)   bf16 (binary -> exact)
    mask = pm[:, num_ins:]                           # (P, I*C) bf16 (binary)

    # --- aggregation: ONE MXU matmul (P, I) @ (I, 2hs) --------------------------
    agg = jnp.dot(p2i, g_ref[0], preferred_element_type=jnp.float32)  # (P, 2hs) f32

    l_bf = l_ref[0]                                  # (P, 2hs) bf16, layout [lh | lt]
    l = l_bf.astype(jnp.float32)
    lh, lt = l[:, :hs], l[:, hs:]
    gh, gt = agg[:, :hs], agg[:, hs:]

    # --- MLP input: slice-write bf16 scratch (no concats), layout
    #     [ lh | lt | gh | gt | |lh-lt| | |gh-gt| | lh*lt | gh*gt ]
    #     (W1 rows are permuted wrapper-side to match this layout). ---------------
    feat_ref[:, 0:2 * hs] = l_bf
    feat_ref[:, 2 * hs:4 * hs] = agg.astype(jnp.bfloat16)
    feat_ref[:, 4 * hs:5 * hs] = jnp.abs(lh - lt).astype(jnp.bfloat16)
    feat_ref[:, 5 * hs:6 * hs] = jnp.abs(gh - gt).astype(jnp.bfloat16)
    feat_ref[:, 6 * hs:7 * hs] = (lh * lt).astype(jnp.bfloat16)
    feat_ref[:, 7 * hs:8 * hs] = (gh * gt).astype(jnp.bfloat16)

    b = b_ref[...]                                   # (1, 2hs + C) f32 = [b1 | b2]
    b1 = b[:, :2 * hs]
    b2 = b[:, 2 * hs:]

    # --- 2-layer MLP: one fused K=8hs contraction, bias added once --------------
    pre1 = jnp.dot(feat_ref[...], w1_ref[...],
                   preferred_element_type=jnp.float32) + b1          # (P, 2hs) f32
    h1 = jnp.maximum(pre1, 0.0)
    # TODO(synk): nn.Dropout is identity at inference; no stochastic dropout applied.
    logits = jnp.dot(h1.astype(jnp.bfloat16), w2_ref[...],
                     preferred_element_type=jnp.float32) + b2        # (P, C) f32

    # --- masked max-pool over paths (pool-then-sigmoid), lane-dense output ------
    tiled = jnp.concatenate([logits] * num_ins, axis=-1)             # (P, I*C)
    masked = jnp.where(mask > 0, tiled, jnp.float32(-3.0e38))
    pooled = jnp.max(masked, axis=0, keepdims=True)                  # (1, I*C)
    out_ref[0] = jax.nn.sigmoid(pooled)


def entity_classifier_batched(global_head, global_tail, local_head, local_tail,
                              path2ins, w1, b1, w2, b2):
    """B independent problems sharing the MLP weights. Returns (B, I, C) f32."""
    B, P, I = path2ins.shape
    hs = global_head.shape[-1]
    C = w2.shape[-1]

    # ---- wrapper-side packing (free XLA layout plumbing) ------------------------
    # path2ins + expanded pool mask (each column repeated C times) in ONE bf16 buffer.
    p2i = path2ins.astype(jnp.float32)
    mask_exp = jnp.repeat(p2i, C, axis=-1)                            # (B, P, I*C)
    pm = jnp.concatenate([p2i, mask_exp], axis=-1).astype(jnp.bfloat16)

    g_pack = jnp.concatenate([global_head, global_tail], -1).astype(jnp.bfloat16)
    l_pack = jnp.concatenate([local_head, local_tail], -1).astype(jnp.bfloat16)

    # W1 rows permuted from the torch feat layout [lh|gh|lt|gt|abs|mul] to the
    # kernel's [lh|lt|gh|gt|abs|mul] layout; b1 and b2 merged into one bias row.
    w1p = jnp.concatenate(
        [w1[0:hs], w1[2 * hs:3 * hs], w1[hs:2 * hs], w1[3 * hs:]],
        axis=0).astype(jnp.bfloat16)                                  # (8hs, 2hs)
    b_pack = jnp.concatenate(
        [b1.reshape(-1), b2.reshape(-1)]).reshape(1, -1).astype(jnp.float32)
    w2b = w2.astype(jnp.bfloat16)

    kernel = functools.partial(_entity_classifier_kernel, hs=hs, num_ins=I)

    grid_spec = pltpu.PrefetchScalarGridSpec(
        num_scalar_prefetch=0,
        grid=(B,),                      # one problem per grid step (see NOTE above)
        in_specs=[
            pl.BlockSpec((1, P, I * (C + 1)), lambda b: (b, 0, 0)),   # p2i + mask
            pl.BlockSpec((1, I, 2 * hs), lambda b: (b, 0, 0)),        # [gh | gt]
            pl.BlockSpec((1, P, 2 * hs), lambda b: (b, 0, 0)),        # [lh | lt]
            # shared weights/biases: constant index_map -> resident across steps
            pl.BlockSpec((8 * hs, 2 * hs), lambda b: (0, 0)),         # W1 (permuted)
            pl.BlockSpec((1, 2 * hs + C), lambda b: (0, 0)),          # [b1 | b2]
            pl.BlockSpec((2 * hs, C), lambda b: (0, 0)),              # W2
        ],
        out_specs=pl.BlockSpec((1, 1, I * C), lambda b: (b, 0, 0)),   # lane-dense row
        scratch_shapes=[pltpu.VMEM((P, 8 * hs), jnp.bfloat16)],       # feat tile
    )

    out = pl.pallas_call(
        kernel,
        out_shape=jax.ShapeDtypeStruct((B, 1, I * C), jnp.float32),
        grid_spec=grid_spec,
        compiler_params=pltpu.CompilerParams(
            dimension_semantics=("parallel",)),       # shards over v7x's 2 TCs
    )(pm, g_pack, l_pack, w1p, b_pack, w2b)

    return out.reshape(B, I, C)


def entity_classifier(global_head, global_tail, local_head, local_tail, path2ins,
                      w1, b1, w2, b2):
    """Single-problem entry point matching the PyTorch module forward (eval mode)."""
    out = entity_classifier_batched(global_head[None], global_tail[None],
                                    local_head[None], local_tail[None],
                                    path2ins[None], w1, b1, w2, b2)
    return out[0]


def entity_classifier_ref(global_head, global_tail, local_head, local_tail,
                          path2ins, w1, b1, w2, b2):
    """Pure-JAX f32 reference matching the PyTorch forward (eval mode), one problem."""
    gh = path2ins @ global_head
    gt = path2ins @ global_tail
    h = jnp.concatenate([local_head, gh], -1)
    t = jnp.concatenate([local_tail, gt], -1)
    feat = jnp.concatenate([h, t, jnp.abs(h - t), h * t], -1)
    h1 = jax.nn.relu(feat @ w1 + b1)
    pred = jax.nn.sigmoid(h1 @ w2 + b2)                       # (P, C)
    masked = pred[None, :, :] * path2ins.T[:, :, None]        # (I, P, C)
    return jnp.max(masked, axis=1)                            # (I, C)


if __name__ == "__main__":
    hs = 32          # hidden size
    P = 16           # paths per problem
    I = 8            # instances (entity pairs) per problem
    C = 4            # num_class
    B = 4            # independent problems sharing the MLP weights

    key = jax.random.PRNGKey(0)
    kgh, kgt, klh, klt, kas, kw1, kb1, kw2, kb2 = jax.random.split(key, 9)

    global_head = jax.random.normal(kgh, (B, I, hs), jnp.float32)
    global_tail = jax.random.normal(kgt, (B, I, hs), jnp.float32)
    local_head = jax.random.normal(klh, (B, P, hs), jnp.float32)
    local_tail = jax.random.normal(klt, (B, P, hs), jnp.float32)
    # binary path -> instance assignment matrix (each path maps to one instance)
    assign = jax.random.randint(kas, (B, P), 0, I)
    path2ins = jax.nn.one_hot(assign, I, dtype=jnp.float32)          # (B, P, I)

    # deterministic params (torch Linear(8*hs -> 2*hs) / Linear(2*hs -> C), weight.T)
    w1 = 0.05 * jax.random.normal(kw1, (8 * hs, 2 * hs), jnp.float32)
    b1 = 0.05 * jax.random.normal(kb1, (2 * hs,), jnp.float32)
    w2 = 0.05 * jax.random.normal(kw2, (2 * hs, C), jnp.float32)
    b2 = 0.05 * jax.random.normal(kb2, (C,), jnp.float32)

    out = entity_classifier_batched(global_head, global_tail, local_head,
                                    local_tail, path2ins, w1, b1, w2, b2)
    out = jax.block_until_ready(out)
    assert out.shape == (B, I, C)

    ref = jax.vmap(lambda g_h, g_t, l_h, l_t, p: entity_classifier_ref(
        g_h, g_t, l_h, l_t, p, w1, b1, w2, b2))(
        global_head, global_tail, local_head, local_tail, path2ins)

    # bf16 MXU operands / bf16 activation DMA with f32 accumulation -> relaxed tol.
    assert jnp.allclose(out, ref, rtol=1e-2, atol=1e-2), (out, ref)

    # module-equivalent single-problem entry point (B = 1 through the same kernel)
    out0 = entity_classifier(global_head[0], global_tail[0], local_head[0],
                             local_tail[0], path2ins[0], w1, b1, w2, b2)
    out0 = jax.block_until_ready(out0)
    assert jnp.allclose(out0, ref[0], rtol=1e-2, atol=1e-2), (out0, ref[0])

    print("KERNEL_OK")
</pallas_src>

<mosaic_0001>
module attributes {stable_mosaic.version = 11 : i64} {
  func.func @_entity_classifier_kernel(%arg0: i32, %arg1: memref<1x16x40xbf16, #tpu.memory_space<vmem>>, %arg2: memref<1x8x64xbf16, #tpu.memory_space<vmem>>, %arg3: memref<1x16x64xbf16, #tpu.memory_space<vmem>>, %arg4: memref<256x64xbf16, #tpu.memory_space<vmem>>, %arg5: memref<1x68xf32, #tpu.memory_space<vmem>>, %arg6: memref<64x4xbf16, #tpu.memory_space<vmem>>, %arg7: memref<1x1x32xf32, #tpu.memory_space<vmem>>, %arg8: memref<16x256xbf16, #tpu.memory_space<vmem>>) attributes {dimension_semantics = [#tpu.dimension_semantics<parallel>], iteration_bounds = array<i64: 4>, scalar_prefetch = 0 : i64, scratch_operands = 1 : i64, tpu.core_type = #tpu.core_type<tc>, window_params = [{transform_indices = @transform_0, window_bounds = array<i64: 1, 16, 40>}, {transform_indices = @transform_1, window_bounds = array<i64: 1, 8, 64>}, {transform_indices = @transform_2, window_bounds = array<i64: 1, 16, 64>}, {pipeline_mode = #tpu.pipeline_mode<synchronous>, transform_indices = @transform_3, window_bounds = array<i64: 256, 64>}, {pipeline_mode = #tpu.pipeline_mode<synchronous>, transform_indices = @transform_4, window_bounds = array<i64: 1, 68>}, {pipeline_mode = #tpu.pipeline_mode<synchronous>, transform_indices = @transform_5, window_bounds = array<i64: 64, 4>}, {transform_indices = @transform_6, window_bounds = array<i64: 1, 1, 32>}]} {
    %c0 = arith.constant 0 : index
    %c0_0 = arith.constant 0 : index
    %c0_1 = arith.constant 0 : index
    %0 = vector.load %arg1[%c0, %c0_0, %c0_1] : memref<1x16x40xbf16, #tpu.memory_space<vmem>>, vector<1x16x40xbf16>
    %1 = vector.shape_cast %0 : vector<1x16x40xbf16> to vector<16x40xbf16>
    %2 = vector.extract_strided_slice %1 {offsets = [0, 0], sizes = [16, 8], strides = [1, 1]} : vector<16x40xbf16> to vector<16x8xbf16>
    %3 = vector.extract_strided_slice %1 {offsets = [0, 8], sizes = [16, 32], strides = [1, 1]} : vector<16x40xbf16> to vector<16x32xbf16>
    %c0_2 = arith.constant 0 : index
    %c0_3 = arith.constant 0 : index
    %c0_4 = arith.constant 0 : index
    %4 = vector.load %arg2[%c0_2, %c0_3, %c0_4] : memref<1x8x64xbf16, #tpu.memory_space<vmem>>, vector<1x8x64xbf16>
    %5 = vector.shape_cast %4 : vector<1x8x64xbf16> to vector<8x64xbf16>
    %cst = arith.constant dense<0.000000e+00> : vector<16x64xf32>
    %6 = tpu.matmul %2, %5, %cst {dimension_numbers = #tpu.dot_dimension_numbers<[1], [0], [0], [1], [0, 0, 1, 1], [], []>} : vector<16x8xbf16>, vector<8x64xbf16>, vector<16x64xf32> -> vector<16x64xf32>
    %c0_5 = arith.constant 0 : index
    %c0_6 = arith.constant 0 : index
    %c0_7 = arith.constant 0 : index
    %7 = vector.load %arg3[%c0_5, %c0_6, %c0_7] : memref<1x16x64xbf16, #tpu.memory_space<vmem>>, vector<1x16x64xbf16>
    %8 = vector.shape_cast %7 : vector<1x16x64xbf16> to vector<16x64xbf16>
    %9 = arith.extf %8 : vector<16x64xbf16> to vector<16x64xf32>
    %10 = vector.extract_strided_slice %9 {offsets = [0, 0], sizes = [16, 32], strides = [1, 1]} : vector<16x64xf32> to vector<16x32xf32>
    %11 = vector.extract_strided_slice %9 {offsets = [0, 32], sizes = [16, 32], strides = [1, 1]} : vector<16x64xf32> to vector<16x32xf32>
    %12 = vector.extract_strided_slice %6 {offsets = [0, 0], sizes = [16, 32], strides = [1, 1]} : vector<16x64xf32> to vector<16x32xf32>
    %13 = vector.extract_strided_slice %6 {offsets = [0, 32], sizes = [16, 32], strides = [1, 1]} : vector<16x64xf32> to vector<16x32xf32>
    %c0_8 = arith.constant 0 : index
    %c0_9 = arith.constant 0 : index
    %14 = vector.load %arg8[%c0_8, %c0_9] : memref<16x256xbf16, #tpu.memory_space<vmem>>, vector<16x64xbf16>
    tpu.vector_store %arg8[%c0_8, %c0_9], %8 {strides = array<i32>} : memref<16x256xbf16, #tpu.memory_space<vmem>>, vector<16x64xbf16>,
    %15 = arith.truncf %6 : vector<16x64xf32> to vector<16x64xbf16>
    %c0_10 = arith.constant 0 : index
    %c64 = arith.constant 64 : index
    %16 = vector.load %arg8[%c0_10, %c64] : memref<16x256xbf16, #tpu.memory_space<vmem>>, vector<16x64xbf16>
    tpu.vector_store %arg8[%c0_10, %c64], %15 {strides = array<i32>} : memref<16x256xbf16, #tpu.memory_space<vmem>>, vector<16x64xbf16>,
    %17 = arith.subf %10, %11 : vector<16x32xf32>
    %18 = math.absf %17 : vector<16x32xf32>
    %19 = arith.truncf %18 : vector<16x32xf32> to vector<16x32xbf16>
    %c0_11 = arith.constant 0 : index
    %c128 = arith.constant 128 : index
    %20 = vector.load %arg8[%c0_11, %c128] : memref<16x256xbf16, #tpu.memory_space<vmem>>, vector<16x32xbf16>
    tpu.vector_store %arg8[%c0_11, %c128], %19 {strides = array<i32>} : memref<16x256xbf16, #tpu.memory_space<vmem>>, vector<16x32xbf16>,
    %21 = arith.subf %12, %13 : vector<16x32xf32>
    %22 = math.absf %21 : vector<16x32xf32>
    %23 = arith.truncf %22 : vector<16x32xf32> to vector<16x32xbf16>
    %c0_12 = arith.constant 0 : index
    %c160 = arith.constant 160 : index
    %24 = vector.load %arg8[%c0_12, %c160] : memref<16x256xbf16, #tpu.memory_space<vmem>>, vector<16x32xbf16>
    tpu.vector_store %arg8[%c0_12, %c160], %23 {strides = array<i32>} : memref<16x256xbf16, #tpu.memory_space<vmem>>, vector<16x32xbf16>,
    %25 = arith.mulf %10, %11 : vector<16x32xf32>
    %26 = arith.truncf %25 : vector<16x32xf32> to vector<16x32xbf16>
    %c0_13 = arith.constant 0 : index
    %c192 = arith.constant 192 : index
    %27 = vector.load %arg8[%c0_13, %c192] : memref<16x256xbf16, #tpu.memory_space<vmem>>, vector<16x32xbf16>
    tpu.vector_store %arg8[%c0_13, %c192], %26 {strides = array<i32>} : memref<16x256xbf16, #tpu.memory_space<vmem>>, vector<16x32xbf16>,
    %28 = arith.mulf %12, %13 : vector<16x32xf32>
    %29 = arith.truncf %28 : vector<16x32xf32> to vector<16x32xbf16>
    %c0_14 = arith.constant 0 : index
    %c224 = arith.constant 224 : index
    %30 = vector.load %arg8[%c0_14, %c224] : memref<16x256xbf16, #tpu.memory_space<vmem>>, vector<16x32xbf16>
    tpu.vector_store %arg8[%c0_14, %c224], %29 {strides = array<i32>} : memref<16x256xbf16, #tpu.memory_space<vmem>>, vector<16x32xbf16>,
    %c0_15 = arith.constant 0 : index
    %c0_16 = arith.constant 0 : index
    %31 = vector.load %arg5[%c0_15, %c0_16] : memref<1x68xf32, #tpu.memory_space<vmem>>, vector<1x68xf32>
    %32 = vector.extract_strided_slice %31 {offsets = [0, 0], sizes = [1, 64], strides = [1, 1]} : vector<1x68xf32> to vector<1x64xf32>
    %33 = vector.extract_strided_slice %31 {offsets = [0, 64], sizes = [1, 4], strides = [1, 1]} : vector<1x68xf32> to vector<1x4xf32>
    %c0_17 = arith.constant 0 : index
    %c0_18 = arith.constant 0 : index
    %34 = vector.load %arg8[%c0_17, %c0_18] : memref<16x256xbf16, #tpu.memory_space<vmem>>, vector<16x256xbf16>
    %c0_19 = arith.constant 0 : index
    %c0_20 = arith.constant 0 : index
    %35 = vector.load %arg4[%c0_19, %c0_20] : memref<256x64xbf16, #tpu.memory_space<vmem>>, vector<256x64xbf16>
    %cst_21 = arith.constant dense<0.000000e+00> : vector<16x64xf32>
    %36 = tpu.matmul %34, %35, %cst_21 {dimension_numbers = #tpu.dot_dimension_numbers<[1], [0], [0], [1], [0, 0, 1, 1], [], []>} : vector<16x256xbf16>, vector<256x64xbf16>, vector<16x64xf32> -> vector<16x64xf32>
    %37 = vector.broadcast %32 : vector<1x64xf32> to vector<16x64xf32>
    %38 = arith.addf %36, %37 : vector<16x64xf32>
    %cst_22 = arith.constant 0.000000e+00 : f32
    %39 = vector.broadcast %cst_22 : f32 to vector<16x64xf32>
    %40 = arith.maximumf %38, %39 : vector<16x64xf32>
    %41 = arith.truncf %40 : vector<16x64xf32> to vector<16x64xbf16>
    %c0_23 = arith.constant 0 : index
    %c0_24 = arith.constant 0 : index
    %42 = vector.load %arg6[%c0_23, %c0_24] : memref<64x4xbf16, #tpu.memory_space<vmem>>, vector<64x4xbf16>
    %cst_25 = arith.constant dense<0.000000e+00> : vector<16x4xf32>
    %43 = tpu.matmul %41, %42, %cst_25 {dimension_numbers = #tpu.dot_dimension_numbers<[1], [0], [0], [1], [0, 0, 1, 1], [], []>} : vector<16x64xbf16>, vector<64x4xbf16>, vector<16x4xf32> -> vector<16x4xf32>
    %44 = vector.broadcast %33 : vector<1x4xf32> to vector<16x4xf32>
    %45 = arith.addf %43, %44 : vector<16x4xf32>
    %46 = tpu.concatenate %45, %45, %45, %45, %45, %45, %45, %45 in 1 : vector<16x4xf32>, vector<16x4xf32>, vector<16x4xf32>, vector<16x4xf32>, vector<16x4xf32>, vector<16x4xf32>, vector<16x4xf32>, vector<16x4xf32> -> vector<16x32xf32>
    %cst_26 = arith.constant 0.000000e+00 : bf16
    %47 = vector.broadcast %cst_26 : bf16 to vector<16x32xbf16>
    %48 = arith.cmpf ogt, %3, %47 : vector<16x32xbf16>
    %cst_27 = arith.constant -3.000000e+38 : f32
    %49 = vector.broadcast %cst_27 : f32 to vector<16x32xf32>
    %50 = arith.select %48, %46, %49 : vector<16x32xi1>, vector<16x32xf32>
    %cst_28 = arith.constant dense<0xFF800000> : vector<32xf32>
    %51 = vector.multi_reduction <maximumf>, %50, %cst_28 [0] : vector<16x32xf32> to vector<32xf32>
    %52 = vector.shape_cast %51 : vector<32xf32> to vector<1x32xf32>
    %53 = arith.negf %52 : vector<1x32xf32>
    %54 = math.exp %53 : vector<1x32xf32>
    %cst_29 = arith.constant 1.000000e+00 : f32
    %55 = vector.broadcast %cst_29 : f32 to vector<1x32xf32>
    %56 = arith.addf %55, %54 : vector<1x32xf32>
    %57 = arith.divf %55, %56 : vector<1x32xf32>
    %c0_30 = arith.constant 0 : index
    %c0_31 = arith.constant 0 : index
    %c0_32 = arith.constant 0 : index
    %58 = vector.load %arg7[%c0_30, %c0_31, %c0_32] : memref<1x1x32xf32, #tpu.memory_space<vmem>>, vector<1x1x32xf32>
    %59 = vector.shape_cast %58 : vector<1x1x32xf32> to vector<1x32xf32>
    %60 = vector.shape_cast %57 : vector<1x32xf32> to vector<1x1x32xf32>
    tpu.vector_store %arg7[%c0_30, %c0_31, %c0_32], %60 {strides = array<i32>} : memref<1x1x32xf32, #tpu.memory_space<vmem>>, vector<1x1x32xf32>,
    return
  }
  func.func @transform_0(%arg0: i32) -> (i32, i32, i32) {
    %c0_i32 = arith.constant 0 : i32
    %c0_i32_0 = arith.constant 0 : i32
    %c0_i32_1 = arith.constant 0 : i32
    return %arg0, %c0_i32, %c0_i32_0 : i32, i32, i32
  }
  func.func @transform_1(%arg0: i32) -> (i32, i32, i32) {
    %c0_i32 = arith.constant 0 : i32
    %c0_i32_0 = arith.constant 0 : i32
    %c0_i32_1 = arith.constant 0 : i32
    return %arg0, %c0_i32, %c0_i32_0 : i32, i32, i32
  }
  func.func @transform_2(%arg0: i32) -> (i32, i32, i32) {
    %c0_i32 = arith.constant 0 : i32
    %c0_i32_0 = arith.constant 0 : i32
    %c0_i32_1 = arith.constant 0 : i32
    return %arg0, %c0_i32, %c0_i32_0 : i32, i32, i32
  }
  func.func @transform_3(%arg0: i32) -> (i32, i32) {
    %c0_i32 = arith.constant 0 : i32
    %c0_i32_0 = arith.constant 0 : i32
    %c0_i32_1 = arith.constant 0 : i32
    return %c0_i32, %c0_i32_0 : i32, i32
  }
  func.func @transform_4(%arg0: i32) -> (i32, i32) {
    %c0_i32 = arith.constant 0 : i32
    %c0_i32_0 = arith.constant 0 : i32
    %c0_i32_1 = arith.constant 0 : i32
    return %c0_i32, %c0_i32_0 : i32, i32
  }
  func.func @transform_5(%arg0: i32) -> (i32, i32) {
    %c0_i32 = arith.constant 0 : i32
    %c0_i32_0 = arith.constant 0 : i32
    %c0_i32_1 = arith.constant 0 : i32
    return %c0_i32, %c0_i32_0 : i32, i32
  }
  func.func @transform_6(%arg0: i32) -> (i32, i32, i32) {
    %c0_i32 = arith.constant 0 : i32
    %c0_i32_0 = arith.constant 0 : i32
    %c0_i32_1 = arith.constant 0 : i32
    return %arg0, %c0_i32, %c0_i32_0 : i32, i32, i32
  }
}

</mosaic_0001>

<llo_original>
// kernel: tpu_custom_call.1
$region0: #{tpu_custom_call.1}
  #allocation0 [shape = 'u32[]', space=smem, size = 0x4, offset = 0x4, fixed_abs, tag = 'smem constant byte address 0x4 - core index']
  #allocation1 [shape = 'u32[72,128]{1,0:T(1,128)}', space=vmem, size = 0x9000, scoped, tag = 'internal scratch']
  #allocation2 [shape = 'bf16[16,256]{1,0:T(8,128)(2,1)}', space=vmem, size = 0x2000, scoped, tag = 'scratch operand']
  %s0 = inlined_call_operand.vmem [shape: bf16[4,16,40], index: 0, kind: input, shape index: {}]
  %s1 = inlined_call_operand.vmem [shape: bf16[4,8,64], index: 1, kind: input, shape index: {}]
  %s2 = inlined_call_operand.vmem [shape: bf16[4,16,64], index: 2, kind: input, shape index: {}]
  %s3 = inlined_call_operand.vmem [shape: bf16[256,64], index: 3, kind: input, shape index: {}]
  %s4 = inlined_call_operand.vmem [shape: f32[1,68], index: 4, kind: input, shape index: {}]
  %s5 = inlined_call_operand.vmem [shape: bf16[64,4], index: 5, kind: input, shape index: {}]
  %s6 = inlined_call_operand.hbm [shape: f32[4,1,32], index: 6, kind: output, shape index: {}]
  %s7 = sld [smem:[#allocation0]]
  $region57: #{tpu_custom_call.1} parent=0
    _
  %s9 = ssub.s32 1, %s7
  %s10 = scalar_select 0, %s9, %s7
  $region1: #{tpu_custom_call.1} parent=0
    #allocation3 [shape = 'u8[1024]{0}', space=vmem, size = 0x400, scoped, tag = 'output window, operand 0']
    #allocation4 [shape = 's32[2]{0}', space=sflag, size = 0x8, scoped, tag = 'scoped memory for tpu_custom_call.1']
    %11 = vsyncpa [#allocation4], 0
    %s12 = scalar_lea.sflag [#allocation4], 1
    %13 = vsyncpa %s12, 0
    loop: start=0, step=1, limit=6
    $region2: #{tpu_custom_call.1} parent=1 // loop_pre_header
      _
    $region3: #{tpu_custom_call.1} parent=1 // loop_header
      %s15 = sphi 0, %s19
      %p16 = scmp.ge.s32.totalorder %s15, 6
      %s25 = sphi 0, %s27
      %s28 = sphi 0, %s25
      %s29 = sphi 0, %s28
      %s45 = sphi 0, %s29
      %s51 = sphi 0, %s53
      %s54 = sphi 0, %s51
      %s55 = sphi 0, %s54
      %s71 = sphi 0, %s55
      %s77 = sphi 0, %s79
      %s80 = sphi 0, %s77
      %s81 = sphi 0, %s80
      %s97 = sphi 0, %s81
      %s101 = sphi 0, %s101
      %s103 = sphi 0, %s101
      %s104 = sphi 0, %s103
      %s118 = sphi 0, %s104
      %s122 = sphi 0, %s122
      %s124 = sphi 0, %s122
      %s125 = sphi 0, %s124
      %s139 = sphi 0, %s125
      %s143 = sphi 0, %s143
      %s145 = sphi 0, %s143
      %s146 = sphi 0, %s145
      %s160 = sphi 0, %s146
      %s166 = sphi 0, %s168
      %s169 = sphi 0, %s166
      %s170 = sphi 0, %s169
      %s186 = sphi 0, %s170
    $region4: #{tpu_custom_call.1} parent=1 // loop_header_branch
      %18 = sbr.rel (%p16) target = $region8
    $region5: #{tpu_custom_call.1} parent=1 // loop_body
      %s20 = ssub.s32 %s15, 1
      %s21 = ssub.s32 %s15, 2
      %s22 = sadd.s32 %s15, 1
      %s23 = ssub.s32 %s15, %s22
      %p24 = scmp.eq.s32.totalorder %s23, 0
      %s26 = sadd.s32 %s25, 1
      %s27 = scalar_select %p24, %s25, %s26
      %p30 = pneg %p24
      %p31 = scmp.eq.s32.totalorder %s15, 3
      %p32 = por %p30, %p31
      %p33 = scmp.ne.s32.totalorder %s25, %s28
      %p34 = scmp.eq.s32.totalorder %s15, 0
      %p35 = por %p33, %p34
      %p36 = scmp.ne.s32.totalorder %s25, %s28
      %p37 = scmp.eq.s32.totalorder %s20, 3
      %p38 = por %p36, %p37
      %p39 = scmp.ne.s32.totalorder %s28, %s29
      %p40 = scmp.eq.s32.totalorder %s20, 0
      %p41 = por %p39, %p40
      %p42 = scmp.ne.s32.totalorder %s28, %s29
      %p43 = scmp.eq.s32.totalorder %s21, 3
      %p44 = por %p42, %p43
      %p46 = scmp.ne.s32.totalorder %s29, %s45
      %p47 = scmp.eq.s32.totalorder %s21, 0
      %p48 = por %p46, %p47
      %s49 = ssub.s32 %s15, %s22
      %p50 = scmp.eq.s32.totalorder %s49, 0
      %s52 = sadd.s32 %s51, 1
      %s53 = scalar_select %p50, %s51, %s52
      %p56 = pneg %p50
      %p57 = scmp.eq.s32.totalorder %s15, 3
      %p58 = por %p56, %p57
      %p59 = scmp.ne.s32.totalorder %s51, %s54
      %p60 = scmp.eq.s32.totalorder %s15, 0
      %p61 = por %p59, %p60
      %p62 = scmp.ne.s32.totalorder %s51, %s54
      %p63 = scmp.eq.s32.totalorder %s20, 3
      %p64 = por %p62, %p63
      %p65 = scmp.ne.s32.totalorder %s54, %s55
      %p66 = scmp.eq.s32.totalorder %s20, 0
      %p67 = por %p65, %p66
      %p68 = scmp.ne.s32.totalorder %s54, %s55
      %p69 = scmp.eq.s32.totalorder %s21, 3
      %p70 = por %p68, %p69
      %p72 = scmp.ne.s32.totalorder %s55, %s71
      %p73 = scmp.eq.s32.totalorder %s21, 0
      %p74 = por %p72, %p73
      %s75 = ssub.s32 %s15, %s22
      %p76 = scmp.eq.s32.totalorder %s75, 0
      %s78 = sadd.s32 %s77, 1
      %s79 = scalar_select %p76, %s77, %s78
      %p82 = pneg %p76
      %p83 = scmp.eq.s32.totalorder %s15, 3
      %p84 = por %p82, %p83
      %p85 = scmp.ne.s32.totalorder %s77, %s80
      %p86 = scmp.eq.s32.totalorder %s15, 0
      %p87 = por %p85, %p86
      %p88 = scmp.ne.s32.totalorder %s77, %s80
      %p89 = scmp.eq.s32.totalorder %s20, 3
      %p90 = por %p88, %p89
      %p91 = scmp.ne.s32.totalorder %s80, %s81
      %p92 = scmp.eq.s32.totalorder %s20, 0
      %p93 = por %p91, %p92
      %p94 = scmp.ne.s32.totalorder %s80, %s81
      %p95 = scmp.eq.s32.totalorder %s21, 3
      %p96 = por %p94, %p95
      %p98 = scmp.ne.s32.totalorder %s81, %s97
      %p99 = scmp.eq.s32.totalorder %s21, 0
      %p100 = por %p98, %p99
      %s102 = sadd.s32 %s101, 1
      %p105 = scmp.eq.s32.totalorder %s15, 3
      %p106 = scmp.ne.s32.totalorder %s101, %s103
      %p107 = scmp.eq.s32.totalorder %s15, 0
      %p108 = por %p106, %p107
      %p109 = scmp.ne.s32.totalorder %s101, %s103
      %p110 = scmp.eq.s32.totalorder %s20, 3
      %p111 = por %p109, %p110
      %p112 = scmp.ne.s32.totalorder %s103, %s104
      %p113 = scmp.eq.s32.totalorder %s20, 0
      %p114 = por %p112, %p113
      %p115 = scmp.ne.s32.totalorder %s103, %s104
      %p116 = scmp.eq.s32.totalorder %s21, 3
      %p117 = por %p115, %p116
      %p119 = scmp.ne.s32.totalorder %s104, %s118
      %p120 = scmp.eq.s32.totalorder %s21, 0
      %p121 = por %p119, %p120
      %s123 = sadd.s32 %s122, 1
      %p126 = scmp.eq.s32.totalorder %s15, 3
      %p127 = scmp.ne.s32.totalorder %s122, %s124
      %p128 = scmp.eq.s32.totalorder %s15, 0
      %p129 = por %p127, %p128
      %p130 = scmp.ne.s32.totalorder %s122, %s124
      %p131 = scmp.eq.s32.totalorder %s20, 3
      %p132 = por %p130, %p131
      %p133 = scmp.ne.s32.totalorder %s124, %s125
      %p134 = scmp.eq.s32.totalorder %s20, 0
      %p135 = por %p133, %p134
      %p136 = scmp.ne.s32.totalorder %s124, %s125
      %p137 = scmp.eq.s32.totalorder %s21, 3
      %p138 = por %p136, %p137
      %p140 = scmp.ne.s32.totalorder %s125, %s139
      %p141 = scmp.eq.s32.totalorder %s21, 0
      %p142 = por %p140, %p141
      %s144 = sadd.s32 %s143, 1
      %p147 = scmp.eq.s32.totalorder %s15, 3
      %p148 = scmp.ne.s32.totalorder %s143, %s145
      %p149 = scmp.eq.s32.totalorder %s15, 0
      %p150 = por %p148, %p149
      %p151 = scmp.ne.s32.totalorder %s143, %s145
      %p152 = scmp.eq.s32.totalorder %s20, 3
      %p153 = por %p151, %p152
      %p154 = scmp.ne.s32.totalorder %s145, %s146
      %p155 = scmp.eq.s32.totalorder %s20, 0
      %p156 = por %p154, %p155
      %p157 = scmp.ne.s32.totalorder %s145, %s146
      %p158 = scmp.eq.s32.totalorder %s21, 3
      %p159 = por %p157, %p158
      %p161 = scmp.ne.s32.totalorder %s146, %s160
      %p162 = scmp.eq.s32.totalorder %s21, 0
      %p163 = por %p161, %p162
      %s164 = ssub.s32 %s15, %s22
      %p165 = scmp.eq.s32.totalorder %s164, 0
      %s167 = sadd.s32 %s166, 1
      %s168 = scalar_select %p165, %s166, %s167
      %p171 = pneg %p165
      %p172 = scmp.eq.s32.totalorder %s15, 3
      %p173 = por %p171, %p172
      %p174 = scmp.ne.s32.totalorder %s166, %s169
      %p175 = scmp.eq.s32.totalorder %s15, 0
      %p176 = por %p174, %p175
      %p177 = scmp.ne.s32.totalorder %s166, %s169
      %p178 = scmp.eq.s32.totalorder %s20, 3
      %p179 = por %p177, %p178
      %p180 = scmp.ne.s32.totalorder %s169, %s170
      %p181 = scmp.eq.s32.totalorder %s20, 0
      %p182 = por %p180, %p181
      %p183 = scmp.ne.s32.totalorder %s169, %s170
      %p184 = scmp.eq.s32.totalorder %s21, 3
      %p185 = por %p183, %p184
      %p187 = scmp.ne.s32.totalorder %s170, %s186
      %p188 = scmp.eq.s32.totalorder %s21, 0
      %p189 = por %p187, %p188
      %p190 = scmp.le.s32.totalorder 1, %s15
      %p191 = scmp.lt.s32.totalorder %s15, 5
      %p192 = pnand %p190, %p191
      %p193 = pneg %p192
      // Predicated region
      $region9: #{tpu_custom_call.1} parent=5 // pred_check
        _
      $region10: #{tpu_custom_call.1} parent=5 // pred_check_branch
        %195 = sbr.rel (%p192) target = $region12
      $region11: #{tpu_custom_call.1} parent=5 // pred_region
        %s196 = ssub.s32 %s15, 1
        // Predicated region
        $region13: #{tpu_custom_call.1} parent=11 // pred_check
          %p197 = pneg %p114
        $region14: #{tpu_custom_call.1} parent=11 // pred_check_branch
          %199 = sbr.rel (%p197) target = $region16
        $region15: #{tpu_custom_call.1} parent=11 // pred_region
          _
        $region16: #{tpu_custom_call.1} parent=11 // pred_fallthru
          _
        // Predicated region
        $region17: #{tpu_custom_call.1} parent=11 // pred_check
          %p200 = pneg %p135
        $region18: #{tpu_custom_call.1} parent=11 // pred_check_branch
          %202 = sbr.rel (%p200) target = $region20
        $region19: #{tpu_custom_call.1} parent=11 // pred_region
          _
        $region20: #{tpu_custom_call.1} parent=11 // pred_fallthru
          _
        // Predicated region
        $region21: #{tpu_custom_call.1} parent=11 // pred_check
          %p203 = pneg %p156
        $region22: #{tpu_custom_call.1} parent=11 // pred_check_branch
          %205 = sbr.rel (%p203) target = $region24
        $region23: #{tpu_custom_call.1} parent=11 // pred_region
          _
        $region24: #{tpu_custom_call.1} parent=11 // pred_fallthru
          _
      $region12: #{tpu_custom_call.1} parent=5 // pred_fallthru
        _
      %p206 = scmp.lt.s32.totalorder %s15, 4
      // Predicated region
      $region25: #{tpu_custom_call.1} parent=5 // pred_check
        %p207 = pneg %p206
      $region26: #{tpu_custom_call.1} parent=5 // pred_check_branch
        %209 = sbr.rel (%p207) target = $region28
      $region27: #{tpu_custom_call.1} parent=5 // pred_region
        // Predicated region
        $region29: #{tpu_custom_call.1} parent=27 // pred_check
          %p210 = pneg %p35
        $region30: #{tpu_custom_call.1} parent=27 // pred_check_branch
          %212 = sbr.rel (%p210) target = $region32
        $region31: #{tpu_custom_call.1} parent=27 // pred_region
          %p213 = scmp.lt.s32.totalorder %s15, 3
          %s214 = scalar_select %p213, %s15, 3
          %s215 = smul.addr %s214, 2
          %s216 = smul.addr %s215, 4
          %s217 = scalar_lea.vmem %s0, %s216
        $region32: #{tpu_custom_call.1} parent=27 // pred_fallthru
          _
        // Predicated region
        $region33: #{tpu_custom_call.1} parent=27 // pred_check
          %p218 = pneg %p61
        $region34: #{tpu_custom_call.1} parent=27 // pred_check_branch
          %220 = sbr.rel (%p218) target = $region36
        $region35: #{tpu_custom_call.1} parent=27 // pred_region
          %p221 = scmp.lt.s32.totalorder %s15, 3
          %s222 = scalar_select %p221, %s15, 3
          %s223 = smul.addr %s222, 4
          %s224 = scalar_lea.vmem %s1, %s223
        $region36: #{tpu_custom_call.1} parent=27 // pred_fallthru
          _
        // Predicated region
        $region37: #{tpu_custom_call.1} parent=27 // pred_check
          %p225 = pneg %p87
        $region38: #{tpu_custom_call.1} parent=27 // pred_check_branch
          %227 = sbr.rel (%p225) target = $region40
        $region39: #{tpu_custom_call.1} parent=27 // pred_region
          %p228 = scmp.lt.s32.totalorder %s15, 3
          %s229 = scalar_select %p228, %s15, 3
          %s230 = smul.addr %s229, 2
          %s231 = smul.addr %s230, 4
          %s232 = scalar_lea.vmem %s2, %s231
        $region40: #{tpu_custom_call.1} parent=27 // pred_fallthru
          _
      $region28: #{tpu_custom_call.1} parent=5 // pred_fallthru
        _
      %p233 = scmp.le.s32.totalorder 1, %s15
      %p234 = scmp.lt.s32.totalorder %s15, 5
      %p235 = pnand %p233, %p234
      %p236 = pneg %p235
      // Predicated region
      $region41: #{tpu_custom_call.1} parent=5 // pred_check
        _
      $region42: #{tpu_custom_call.1} parent=5 // pred_check_branch
        %238 = sbr.rel (%p235) target = $region44
      $region43: #{tpu_custom_call.1} parent=5 // pred_region
        %s239 = ssub.s32 %s15, 1
        %p240 = scmp.lt.s32.totalorder %s20, 3
        %s241 = scalar_select %p240, %s20, 3
        %s242 = smul.addr %s241, 2
        %s243 = smul.addr %s242, 4
        %s244 = scalar_lea.vmem %s0, %s243
        %p245 = pneg %p41
        %p246 = pneg %p38
        %p247 = scmp.lt.s32.totalorder %s20, 3
        %s248 = scalar_select %p247, %s20, 3
        %s249 = smul.addr %s248, 4
        %s250 = scalar_lea.vmem %s1, %s249
        %p251 = pneg %p67
        %p252 = pneg %p64
        %p253 = scmp.lt.s32.totalorder %s20, 3
        %s254 = scalar_select %p253, %s20, 3
        %s255 = smul.addr %s254, 2
        %s256 = smul.addr %s255, 4
        %s257 = scalar_lea.vmem %s2, %s256
        %p258 = pneg %p93
        %p259 = pneg %p90
        %p260 = pneg %p114
        %p261 = pneg %p111
        %p262 = pneg %p135
        %p263 = pneg %p132
        %p264 = pneg %p156
        %p265 = pneg %p153
        %p266 = pneg %p182
        %p267 = pneg %p179
        %s268 = sand.u32 %s169, 1
        %s269 = scalar_lea.sflag [#allocation4], %s268
        %s270 = sand.u32 %s169, 1
        %s271 = scalar_lea.vmem [#allocation3], %s270
        %p272 = scmp.lt.s32.totalorder %s20, 3
        %s273 = scalar_select %p272, %s20, 3
        %s274 = smul.addr %s273, 2
        %s275 = smul.addr %s274, 4
        %s276 = scalar_lea.vmem %s0, %s275
        %p277 = scmp.lt.s32.totalorder %s20, 3
        %s278 = scalar_select %p277, %s20, 3
        %s279 = smul.addr %s278, 4
        %s280 = scalar_lea.vmem %s1, %s279
        %p281 = scmp.lt.s32.totalorder %s20, 3
        %s282 = scalar_select %p281, %s20, 3
        %s283 = smul.addr %s282, 2
        %s284 = smul.addr %s283, 4
        %s285 = scalar_lea.vmem %s2, %s284
        %v287 = vld [vmem:[%s276] sm:$0xf]
        %v288 = vld [vmem:[%s276 + $0x4] sm:$0xf]
        %v289 = vld [vmem:[%s280] sm:$0xf]
        %v292 = vunpack.c.l.b16 %v287
        %v293 = vunpack.c.l.b16 %v288
        %v294 = vpack.c.b16 %v293, %v292
        %vm295 = vcmask 64512
        %v297 = vsel %vm295, %v294, 0
        %vm299 = vcmask 1043456
        %v301 = vsel %vm299, %v289, 0
        %303 = vmatpush.bf16.msra.mxu0 0
        %304 = vmatpush.bf16.msra.mxu0 0
        %305 = vmatpush.bf16.msra.mxu0 0
        %306 = vmatpush.bf16.msra.mxu0 0
        %307 = vmatpush.bf16.msra.mxu0 0
        %308 = vmatpush.bf16.msra.mxu0 0
        %309 = vmatpush.bf16.msra.mxu0 0
        %310 = vmatpush.bf16.msra.mxu0 %v301
        %311 = vmatmul.bf16.gmra.mxu0 %v297
        %v312 = vpop.f32.mrf.mxu0
        %v313 = vadd.f32 0.0, %v312
        %v314 = vpop.f32.mrf.mxu0
        %v315 = vadd.f32 0.0, %v314
        %316 = vdwg.mxu0
        %v317 = vld [vmem:[%s285] sm:$0xf]
        %v318 = vld [vmem:[%s285 + $0x4] sm:$0xf]
        %v319 = vunpack.c.l.bf16 %v317
        %v320 = vunpack.c.l.bf16 %v318
        %vm321 = vcmask 519168
        %322 = vst.msk [vmem:[#allocation2] sm:$0xf] %vm321, %v317
        %323 = vst.msk [vmem:[#allocation2 + $0x8] sm:$0xf] %vm321, %v318
        %v324 = vpack.c.bf16 %v313, %v313
        %v325 = vpack.c.bf16 %v315, %v315
        %328 = vrot.lane.b32.xlu0 %v324, 64
        %v329 = vpop.permute.xlu0 %328
        %330 = vrot.lane.b32.xlu0 %v325, 64
        %v331 = vpop.permute.xlu0 %330
        %vm334 = vcmask 1043968
        %335 = vst.msk [vmem:[#allocation2] sm:$0xf] %vm334, %v329
        %336 = vst.msk [vmem:[#allocation2 + $0x8] sm:$0xf] %vm334, %v331
        %339 = vrot.lane.b32.xlu0 %v319, 96
        %v340 = vpop.permute.xlu0 %339
        %341 = vrot.lane.b32.xlu0 %v320, 96
        %v342 = vpop.permute.xlu0 %341
        %v345 = vsub.f32 %v319, %v340
        %v346 = vsub.f32 %v320, %v342
        %v347 = vand.u32 2147483647, %v345
        %v348 = vand.u32 2147483647, %v346
        %v349 = vpack.c.bf16 %v347, %v347
        %v350 = vpack.c.bf16 %v348, %v348
        %vm351 = vcmask 257024
        %352 = vst.msk [vmem:[#allocation2 + $0x4] sm:$0xf] %vm351, %v349
        %353 = vst.msk [vmem:[#allocation2 + $0xc] sm:$0xf] %vm351, %v350
        %356 = vrot.lane.b32.xlu0 %v313, 96
        %v357 = vpop.permute.xlu0 %356
        %358 = vrot.lane.b32.xlu0 %v315, 96
        %v359 = vpop.permute.xlu0 %358
        %v362 = vsub.f32 %v313, %v357
        %v363 = vsub.f32 %v315, %v359
        %v364 = vand.u32 2147483647, %v362
        %v365 = vand.u32 2147483647, %v363
        %v366 = vpack.c.bf16 %v364, %v364
        %v367 = vpack.c.bf16 %v365, %v365
        %370 = vrot.lane.b32.xlu0 %v366, 32
        %v371 = vpop.permute.xlu0 %370
        %372 = vrot.lane.b32.xlu0 %v367, 32
        %v373 = vpop.permute.xlu0 %372
        %vm376 = vcmask 519424
        %377 = vst.msk [vmem:[#allocation2 + $0x4] sm:$0xf] %vm376, %v371
        %378 = vst.msk [vmem:[#allocation2 + $0xc] sm:$0xf] %vm376, %v373
        %v379 = vmul.f32 %v319, %v340
        %v380 = vmul.f32 %v320, %v342
        %v381 = vpack.c.bf16 %v379, %v379
        %v382 = vpack.c.bf16 %v380, %v380
        %385 = vrot.lane.b32.xlu0 %v381, 64
        %v386 = vpop.permute.xlu0 %385
        %387 = vrot.lane.b32.xlu0 %v382, 64
        %v388 = vpop.permute.xlu0 %387
        %vm391 = vcmask 781824
        %392 = vst.msk [vmem:[#allocation2 + $0x4] sm:$0xf] %vm391, %v386
        %393 = vst.msk [vmem:[#allocation2 + $0xc] sm:$0xf] %vm391, %v388
        %v394 = vmul.f32 %v313, %v357
        %v395 = vmul.f32 %v315, %v359
        %v396 = vpack.c.bf16 %v394, %v394
        %v397 = vpack.c.bf16 %v395, %v395
        %400 = vrot.lane.b32.xlu0 %v396, 96
        %v401 = vpop.permute.xlu0 %400
        %402 = vrot.lane.b32.xlu0 %v397, 96
        %v403 = vpop.permute.xlu0 %402
        %vm406 = vcmask 1044224
        %407 = vst.msk [vmem:[#allocation2 + $0x4] sm:$0xf] %vm406, %v401
        %408 = vst.msk [vmem:[#allocation2 + $0xc] sm:$0xf] %vm406, %v403
        %v409 = vld [vmem:[%s4] sm:$0x1]
        %v410 = vld [vmem:[#allocation2] sm:$0xff]
        %v411 = vld [vmem:[#allocation2 + $0x8] sm:$0xff]
        %v412 = vld [vmem:[%s3] sm:$0xf]
        %v413 = vld [vmem:[%s3 + $0x4] sm:$0xf]
        %v414 = vld [vmem:[%s3 + $0x8] sm:$0xf]
        %v415 = vld [vmem:[%s3 + $0xc] sm:$0xf]
        %v416 = vld [vmem:[%s3 + $0x10] sm:$0xf]
        %v417 = vld [vmem:[%s3 + $0x14] sm:$0xf]
        %v418 = vld [vmem:[%s3 + $0x18] sm:$0xf]
        %v419 = vld [vmem:[%s3 + $0x1c] sm:$0xf]
        %v420 = vld [vmem:[%s3 + $0x20] sm:$0xf]
        %v421 = vld [vmem:[%s3 + $0x24] sm:$0xf]
        %v422 = vld [vmem:[%s3 + $0x28] sm:$0xf]
        %v423 = vld [vmem:[%s3 + $0x2c] sm:$0xf]
        %v424 = vld [vmem:[%s3 + $0x30] sm:$0xf]
        %v425 = vld [vmem:[%s3 + $0x34] sm:$0xf]
        %v426 = vld [vmem:[%s3 + $0x38] sm:$0xf]
        %v427 = vld [vmem:[%s3 + $0x3c] sm:$0xf]
        %v428 = vld [vmem:[%s3 + $0x40] sm:$0xf]
        %v429 = vld [vmem:[%s3 + $0x44] sm:$0xf]
        %v430 = vld [vmem:[%s3 + $0x48] sm:$0xf]
        %v431 = vld [vmem:[%s3 + $0x4c] sm:$0xf]
        %v432 = vld [vmem:[%s3 + $0x50] sm:$0xf]
        %v433 = vld [vmem:[%s3 + $0x54] sm:$0xf]
        %v434 = vld [vmem:[%s3 + $0x58] sm:$0xf]
        %v435 = vld [vmem:[%s3 + $0x5c] sm:$0xf]
        %v436 = vld [vmem:[%s3 + $0x60] sm:$0xf]
        %v437 = vld [vmem:[%s3 + $0x64] sm:$0xf]
        %v438 = vld [vmem:[%s3 + $0x68] sm:$0xf]
        %v439 = vld [vmem:[%s3 + $0x6c] sm:$0xf]
        %v440 = vld [vmem:[%s3 + $0x70] sm:$0xf]
        %v441 = vld [vmem:[%s3 + $0x74] sm:$0xf]
        %v442 = vld [vmem:[%s3 + $0x78] sm:$0xf]
        %v443 = vld [vmem:[%s3 + $0x7c] sm:$0xf]
        %v445 = vperm.slane %v409, 0
        %v449 = vunpack.c.l.b16 %v410
        %v450 = vunpack.c.h.b16 %v410
        %v451 = vunpack.c.l.b16 %v411
        %v452 = vunpack.c.h.b16 %v411
        %v453 = vpack.c.b16 %v451, %v449
        %v454 = vpack.c.b16 %v452, %v450
        %v489 = vunpack.c.l.b16 %v412
        %v490 = vunpack.c.l.b16 %v413
        %v491 = vunpack.c.l.b16 %v414
        %v492 = vunpack.c.l.b16 %v415
        %v493 = vunpack.c.l.b16 %v416
        %v494 = vunpack.c.l.b16 %v417
        %v495 = vunpack.c.l.b16 %v418
        %v496 = vunpack.c.l.b16 %v419
        %v497 = vunpack.c.l.b16 %v420
        %v498 = vunpack.c.l.b16 %v421
        %v499 = vunpack.c.l.b16 %v422
        %v500 = vunpack.c.l.b16 %v423
        %v501 = vunpack.c.l.b16 %v424
        %v502 = vunpack.c.l.b16 %v425
        %v503 = vunpack.c.l.b16 %v426
        %v504 = vunpack.c.l.b16 %v427
        %v505 = vunpack.c.l.b16 %v428
        %v506 = vunpack.c.l.b16 %v429
        %v507 = vunpack.c.l.b16 %v430
        %v508 = vunpack.c.l.b16 %v431
        %v509 = vunpack.c.l.b16 %v432
        %v510 = vunpack.c.l.b16 %v433
        %v511 = vunpack.c.l.b16 %v434
        %v512 = vunpack.c.l.b16 %v435
        %v513 = vunpack.c.l.b16 %v436
        %v514 = vunpack.c.l.b16 %v437
        %v515 = vunpack.c.l.b16 %v438
        %v516 = vunpack.c.l.b16 %v439
        %v517 = vunpack.c.l.b16 %v440
        %v518 = vunpack.c.l.b16 %v441
        %v519 = vunpack.c.l.b16 %v442
        %v520 = vunpack.c.l.b16 %v443
        %v521 = vpack.c.b16 %v490, %v489
        %v522 = vpack.c.b16 %v492, %v491
        %v523 = vpack.c.b16 %v494, %v493
        %v524 = vpack.c.b16 %v496, %v495
        %v525 = vpack.c.b16 %v498, %v497
        %v526 = vpack.c.b16 %v500, %v499
        %v527 = vpack.c.b16 %v502, %v501
        %v528 = vpack.c.b16 %v504, %v503
        %v529 = vpack.c.b16 %v506, %v505
        %v530 = vpack.c.b16 %v508, %v507
        %v531 = vpack.c.b16 %v510, %v509
        %v532 = vpack.c.b16 %v512, %v511
        %v533 = vpack.c.b16 %v514, %v513
        %v534 = vpack.c.b16 %v516, %v515
        %v535 = vpack.c.b16 %v518, %v517
        %v536 = vpack.c.b16 %v520, %v519
        %553 = vmatpush.bf16.msra.mxu0 %v528
        %554 = vmatpush.bf16.msra.mxu0 %v527
        %555 = vmatpush.bf16.msra.mxu0 %v526
        %556 = vmatpush.bf16.msra.mxu0 %v525
        %557 = vmatpush.bf16.msra.mxu0 %v524
        %558 = vmatpush.bf16.msra.mxu0 %v523
        %559 = vmatpush.bf16.msra.mxu0 %v522
        %560 = vmatpush.bf16.msra.mxu0 %v521
        %561 = vmatmul.bf16.gmra.mxu0 %v453
        %v562 = vpop.f32.mrf.mxu0
        %v563 = vadd.f32 %v445, %v562
        %v564 = vpop.f32.mrf.mxu0
        %v565 = vadd.f32 %v445, %v564
        %566 = vdwg.mxu0
        %567 = vmatpush.bf16.msra.mxu0 %v536
        %568 = vmatpush.bf16.msra.mxu0 %v535
        %569 = vmatpush.bf16.msra.mxu0 %v534
        %570 = vmatpush.bf16.msra.mxu0 %v533
        %571 = vmatpush.bf16.msra.mxu0 %v532
        %572 = vmatpush.bf16.msra.mxu0 %v531
        %573 = vmatpush.bf16.msra.mxu0 %v530
        %574 = vmatpush.bf16.msra.mxu0 %v529
        %575 = vmatmul.bf16.gmra.mxu0 %v454
        %v576 = vpop.f32.mrf.mxu0
        %v577 = vadd.f32 %v563, %v576
        %v578 = vpop.f32.mrf.mxu0
        %v579 = vadd.f32 %v565, %v578
        %580 = vdwg.mxu0
        %v581 = vmax.f32 %v577, 0.0
        %v582 = vmax.f32 %v579, 0.0
        %v583 = vpack.c.bf16 %v582, %v581
        %v584 = vld [vmem:[%s5] sm:$0xf]
        %v585 = vld [vmem:[%s5 + $0x4] sm:$0xf]
        %v586 = vld [vmem:[%s5 + $0x8] sm:$0xf]
        %v587 = vld [vmem:[%s5 + $0xc] sm:$0xf]
        %v588 = vld [vmem:[%s5 + $0x10] sm:$0xf]
        %v589 = vld [vmem:[%s5 + $0x14] sm:$0xf]
        %v590 = vld [vmem:[%s5 + $0x18] sm:$0xf]
        %v591 = vld [vmem:[%s5 + $0x1c] sm:$0xf]
        %v600 = vunpack.c.l.b16 %v584
        %v601 = vunpack.c.l.b16 %v585
        %v602 = vunpack.c.l.b16 %v586
        %v603 = vunpack.c.l.b16 %v587
        %v604 = vunpack.c.l.b16 %v588
        %v605 = vunpack.c.l.b16 %v589
        %v606 = vunpack.c.l.b16 %v590
        %v607 = vunpack.c.l.b16 %v591
        %v608 = vpack.c.b16 %v601, %v600
        %v609 = vpack.c.b16 %v603, %v602
        %v610 = vpack.c.b16 %v605, %v604
        %v611 = vpack.c.b16 %v607, %v606
        %616 = vrot.lane.b32.xlu0 %v445, 64
        %v617 = vpop.permute.xlu0 %616
        %vm619 = vcmask 523264
        %v621 = vsel %vm619, %v583, 0
        %623 = vmatpush.bf16.msra.mxu0 0
        %624 = vmatpush.bf16.msra.mxu0 0
        %625 = vmatpush.bf16.msra.mxu0 0
        %626 = vmatpush.bf16.msra.mxu0 0
        %627 = vmatpush.bf16.msra.mxu0 %v611
        %628 = vmatpush.bf16.msra.mxu0 %v610
        %629 = vmatpush.bf16.msra.mxu0 %v609
        %630 = vmatpush.bf16.msra.mxu0 %v608
        %631 = vmatmul.bf16.gmra.mxu0 %v621
        %v632 = vpop.f32.mrf.mxu0
        %v633 = vadd.f32 %v617, %v632
        %v634 = vpop.f32.mrf.mxu0
        %v635 = vadd.f32 %v617, %v634
        %636 = vdwg.mxu0
        %639 = vrot.lane.b32.xlu0 %v633, 4
        %v640 = vpop.permute.xlu0 %639
        %641 = vrot.lane.b32.xlu0 %v635, 4
        %v642 = vpop.permute.xlu0 %641
        %645 = vrot.lane.b32.xlu0 %v633, 8
        %v646 = vpop.permute.xlu0 %645
        %647 = vrot.lane.b32.xlu0 %v635, 8
        %v648 = vpop.permute.xlu0 %647
        %651 = vrot.lane.b32.xlu0 %v633, 12
        %v652 = vpop.permute.xlu0 %651
        %653 = vrot.lane.b32.xlu0 %v635, 12
        %v654 = vpop.permute.xlu0 %653
        %657 = vrot.lane.b32.xlu0 %v633, 16
        %v658 = vpop.permute.xlu0 %657
        %659 = vrot.lane.b32.xlu0 %v635, 16
        %v660 = vpop.permute.xlu0 %659
        %663 = vrot.lane.b32.xlu0 %v633, 20
        %v664 = vpop.permute.xlu0 %663
        %665 = vrot.lane.b32.xlu0 %v635, 20
        %v666 = vpop.permute.xlu0 %665
        %669 = vrot.lane.b32.xlu0 %v633, 24
        %v670 = vpop.permute.xlu0 %669
        %671 = vrot.lane.b32.xlu0 %v635, 24
        %v672 = vpop.permute.xlu0 %671
        %675 = vrot.lane.b32.xlu0 %v633, 28
        %v676 = vpop.permute.xlu0 %675
        %677 = vrot.lane.b32.xlu0 %v635, 28
        %v678 = vpop.permute.xlu0 %677
        %vm681 = vcmask 31744
        %v682 = vsel %vm681, %v633, %v640
        %v683 = vsel %vm681, %v635, %v642
        %v684 = vsel %vm295, %v682, %v646
        %v685 = vsel %vm295, %v683, %v648
        %vm686 = vcmask 97280
        %v687 = vsel %vm686, %v684, %v652
        %v688 = vsel %vm686, %v685, %v654
        %vm689 = vcmask 130048
        %v690 = vsel %vm689, %v687, %v658
        %v691 = vsel %vm689, %v688, %v660
        %vm692 = vcmask 162816
        %v693 = vsel %vm692, %v690, %v664
        %v694 = vsel %vm692, %v691, %v666
        %vm695 = vcmask 195584
        %v696 = vsel %vm695, %v693, %v670
        %v697 = vsel %vm695, %v694, %v672
        %vm698 = vcmask 228352
        %v699 = vsel %vm698, %v696, %v676
        %v700 = vsel %vm698, %v697, %v678
        %v701 = vunpack.c.l.bf16 %v287
        %v702 = vunpack.c.l.bf16 %v288
        %vm703 = vcmp.gt.f32.partialorder %v701, 0.0
        %vm704 = vcmp.gt.f32.partialorder %v702, 0.0
        %707 = vrot.lane.b32.xlu0 %v699, 8
        %v708 = vpop.permute.xlu0 %707
        %709 = vrot.lane.b32.xlu0 %v700, 8
        %v710 = vpop.permute.xlu0 %709
        %v713 = vsel %vm703, %v708, -3e+38
        %v714 = vsel %vm704, %v710, -3e+38
        %vm715 = vcmask 326720
        %v716 = vsel %vm715, %v713, -inf
        %v717 = vsel %vm715, %v714, -inf
        %v718 = vmax.f32 %v716, %v717
        %v719 = vrot.slane %v718, 4
        %v720 = vmax.f32 %v718, %v719
        %v721 = vrot.slane %v720, 2
        %v722 = vmax.f32 %v720, %v721
        %v723 = vrot.slane %v722, 1
        %v724 = vmax.f32 %v722, %v723
        %v725 = vxor.u32 %v724, 2147483648
        %v726 = vmul.f32 %v725, 1.442695
        %v727 = vpow.pop %v726
        %v728 = vadd.f32 %v727, 1.0
        %v729 = vrcp.pop %v728
        %v730 = vmul.f32 %v728, %v729
        %v731 = vsub.f32 1.0, %v730
        %v732 = vmul.f32 %v729, %v731
        %v733 = vadd.f32 %v729, %v732
        %vm734 = vweird.f32 %v728
        %vm735 = vweird.f32 %v729
        %vm736 = vmor %vm734, %vm735
        %v737 = vsel %vm736, %v729, %v733
        %v738 = vand.u32 2147483647, %v728
        %vm739 = vcmp.eq.f32.partialorder %v738, 8.507059e+37
        %v740 = vand.u32 %v728, 2147483648
        %v741 = vor.u32 1.1754944e-38, %v740
        %v742 = vsel %vm739, %v741, %v737
        %v743 = vmul.f32 1.0, %v742
        %745 = vrot.lane.b32.xlu0 %v743, 120
        %v746 = vpop.permute.xlu0 %745
        %vm748 = vcmask 253952
        %749 = vst.msk [vmem:[%s271] sm:$0x1] %vm748, %v746
        %s750 = sand.u32 %s169, 1
        %s751 = scalar_lea.sflag [#allocation4], %s750
        %s752 = sand.u32 %s169, 1
        %s753 = scalar_lea.vmem [#allocation3], %s752
        // Predicated region
        $region45: #{tpu_custom_call.1} parent=43 // pred_check
          %p754 = pneg %p179
        $region46: #{tpu_custom_call.1} parent=43 // pred_check_branch
          %756 = sbr.rel (%p754) target = $region48
        $region47: #{tpu_custom_call.1} parent=43 // pred_region
          %758 = vsyncadd %s751, 0
          %s759 = scalar_lea.hbm %s6, %s20
          %s761 = sshll.u32 %s753, 4
          %s762 = int_to_ptr.vmem [resolvable:$true] %s761
          %s763 = sshll.u32 %s759, 4
          %s764 = int_to_ptr.hbm [resolvable:$true] %s763
          %766 = dma.vmem_to_hbm [thread:$0]  %s762, 16, %s764, %s751
        $region48: #{tpu_custom_call.1} parent=43 // pred_fallthru
          _
      $region44: #{tpu_custom_call.1} parent=5 // pred_fallthru
        _
      %p767 = scmp.le.s32.totalorder 2, %s15
      // Predicated region
      $region49: #{tpu_custom_call.1} parent=5 // pred_check
        %p768 = pneg %p767
      $region50: #{tpu_custom_call.1} parent=5 // pred_check_branch
        %770 = sbr.rel (%p768) target = $region52
      $region51: #{tpu_custom_call.1} parent=5 // pred_region
        %s771 = ssub.s32 %s15, 2
        // Predicated region
        $region53: #{tpu_custom_call.1} parent=51 // pred_check
          %p772 = pneg %p185
        $region54: #{tpu_custom_call.1} parent=51 // pred_check_branch
          %774 = sbr.rel (%p772) target = $region56
        $region55: #{tpu_custom_call.1} parent=51 // pred_region
          %s775 = sand.u32 %s170, 1
          %s776 = scalar_lea.sflag [#allocation4], %s775
          %s777 = sand.u32 %s170, 1
          %s778 = scalar_lea.vmem [#allocation3], %s777
          %780 = dma.done %s776, 16
        $region56: #{tpu_custom_call.1} parent=51 // pred_fallthru
          _
      $region52: #{tpu_custom_call.1} parent=5 // pred_fallthru
        _
    $region6: #{tpu_custom_call.1} parent=1 // loop_footer
      %s19 = sadd.s32 1, %s15
    $region7: #{tpu_custom_call.1} parent=1 // loop_footer_branch
      %14 = sbr.rel target = $region3
    $region8: #{tpu_custom_call.1} parent=1 // loop_exit
      _
    %781 = vsyncpa [#allocation4], 1
    %s782 = scalar_lea.sflag [#allocation4], 1
    %783 = vsyncpa %s782, 1

</llo_original>
